<compile_context>
chip_gen: v6e
topology: v6e:2x2x1
jax: 0.10.0
libtpu: 0.0.40
codegen_flags: <defaults>
</compile_context>

<pallas_src>
import math
import jax
import jax.numpy as jnp
from jax import lax
from jax.experimental import pallas as pl
from jax.experimental.pallas import tpu as pltpu

_INV_SQRT2 = 1.0 / math.sqrt(2.0)


def _lagscale_kernel(x_ref, w_ref, b_ref, o_ref):
    # x_ref: (TM, 2*C_in)  — lag pair per output row, flattened along K
    # w_ref: (2*C_in, Np)  — fused [W0; W1], out-channels zero-padded to Np (mult of 128)
    # b_ref: (1, Np)       — bias, zero-padded, f32
    # o_ref: (TM, Np)      — lane-dense output tile
    acc = jnp.dot(x_ref[...], w_ref[...],
                  preferred_element_type=jnp.float32) + b_ref[...]
    # Exact (erf) GELU, matching torch.nn.GELU(approximate='none').
    y = 0.5 * acc * (1.0 + lax.erf(acc * _INV_SQRT2))
    o_ref[...] = y.astype(o_ref.dtype)


def _round_up(v, m):
    return (v + m - 1) // m * m


def lag_scale_forward(x, conv_weight, conv_bias, *, timestep, scale,
                      use_bf16=False, max_rows_per_tile=1024):
    """x: (B, timestep, C) f32. conv_weight: (C, C, 2, 1). conv_bias: (C,). -> (B, T//2, C)."""
    assert scale == 2, "squeeze(dim=2) in the reference requires scale == 2"
    B, T, C = x.shape
    assert T == timestep and T % scale == 0
    Th = T // scale

    # ---- one-time XLA-side prep: fuse the two lag matmuls into one (2C, Np) matmul ----
    w0 = jnp.transpose(conv_weight[:, :, 0, 0])        # (C_in, C_out)
    w1 = jnp.transpose(conv_weight[:, :, 1, 0])        # (C_in, C_out)
    w = jnp.concatenate([w0, w1], axis=0)              # (2C, C)

    # Lane-dense output: pad out-channels to a multiple of 128 (unmasked stores).
    Np = _round_up(max(C, 1), 128)
    if Np != C:
        w = jnp.pad(w, ((0, 0), (0, Np - C)))
        bias = jnp.pad(conv_bias, (0, Np - C))
    else:
        bias = conv_bias
    bias2d = bias.reshape(1, Np).astype(jnp.float32)

    # Re-associate x so each output row carries both lag slices contiguously:
    # (B, T, C) -> (B, 2, Th, C) -> (B, Th, 2, C) -> (B*Th, 2C)   [done once in XLA]
    x2d = jnp.transpose(x.reshape(B, 2, Th, C), (0, 2, 1, 3)).reshape(B * Th, 2 * C)

    if use_bf16:  # opt-in: halves HBM bytes, f32 accumulation kept in the kernel
        x2d = x2d.astype(jnp.bfloat16)
        w = w.astype(jnp.bfloat16)

    # ---- big, sublane-aligned row tiles over the flattened (B*Th) axis ----
    M = B * Th
    K = 2 * C
    TM = _round_up(min(max_rows_per_tile, _round_up(M, 8)), 8)
    Mpad = _round_up(M, TM)
    if Mpad != M:
        x2d = jnp.pad(x2d, ((0, Mpad - M), (0, 0)))
    grid = (Mpad // TM,)

    bytes_accessed = (Mpad * K * x2d.dtype.itemsize
                      + K * Np * w.dtype.itemsize
                      + Np * 4
                      + Mpad * Np * x.dtype.itemsize)
    cost = pl.CostEstimate(flops=2 * Mpad * K * Np,
                           transcendentals=Mpad * Np,
                           bytes_accessed=bytes_accessed)

    out = pl.pallas_call(
        _lagscale_kernel,
        out_shape=jax.ShapeDtypeStruct((Mpad, Np), x.dtype),
        grid=grid,
        in_specs=[
            pl.BlockSpec((TM, K), lambda i: (i, 0)),
            pl.BlockSpec((K, Np), lambda i: (0, 0)),   # stays VMEM-resident across steps
            pl.BlockSpec((1, Np), lambda i: (0, 0)),
        ],
        out_specs=pl.BlockSpec((TM, Np), lambda i: (i, 0)),
        compiler_params=pltpu.CompilerParams(
            dimension_semantics=("parallel",),
            vmem_limit_bytes=48 * 1024 * 1024,
        ),
        cost_estimate=cost,
    )(x2d, w, bias2d)

    # Strip row / channel padding and restore (B, Th, C).
    return out[:M, :C].reshape(B, Th, C)


def _reference(x, conv_weight, conv_bias, *, timestep, scale):
    """Pure-JAX reference mirroring the PyTorch forward exactly."""
    B, T, C = x.shape
    xc = jnp.transpose(x, (0, 2, 1))                          # (B, C, T)
    xr = xc.reshape(B, C, scale, T // scale)                  # (B, C, 2, Th)
    out = (jnp.einsum('bciw,oci->bow', xr, conv_weight[:, :, :, 0])
           + conv_bias[None, :, None])                        # (B, C, Th)
    gelu = 0.5 * out * (1.0 + lax.erf(out / jnp.sqrt(2.0)))
    return jnp.transpose(gelu, (0, 2, 1))                     # (B, Th, C)


if __name__ == "__main__":
    # Small shapes consistent with the module (scale must be 2).
    B, timestep, channel, scale = 2, 8, 4, 2

    key = jax.random.PRNGKey(0)
    kx, kw, kb = jax.random.split(key, 3)

    x = jax.random.normal(kx, (B, timestep, channel), dtype=jnp.float32)
    fan_in = channel * 2 * 1
    bound = 1.0 / math.sqrt(fan_in)
    conv_weight = jax.random.uniform(kw, (channel, channel, 2, 1),
                                     minval=-bound, maxval=bound, dtype=jnp.float32)
    conv_bias = jax.random.uniform(kb, (channel,),
                                   minval=-bound, maxval=bound, dtype=jnp.float32)

    out = lag_scale_forward(x, conv_weight, conv_bias,
                            timestep=timestep, scale=scale)
    out = jax.block_until_ready(out)

    ref = _reference(x, conv_weight, conv_bias, timestep=timestep, scale=scale)
    assert out.shape == (B, timestep // scale, channel)
    assert jnp.allclose(out, ref, atol=1e-5, rtol=1e-5)

    # Extra validation of the tiled path (multi-step grid + row/channel padding).
    B2, T2, C2 = 3, 12, 5
    k2x, k2w, k2b = jax.random.split(jax.random.PRNGKey(1), 3)
    x2 = jax.random.normal(k2x, (B2, T2, C2), dtype=jnp.float32)
    b2 = 1.0 / math.sqrt(C2 * 2)
    w2 = jax.random.uniform(k2w, (C2, C2, 2, 1), minval=-b2, maxval=b2, dtype=jnp.float32)
    bb2 = jax.random.uniform(k2b, (C2,), minval=-b2, maxval=b2, dtype=jnp.float32)
    out2 = jax.block_until_ready(
        lag_scale_forward(x2, w2, bb2, timestep=T2, scale=2, max_rows_per_tile=8))
    ref2 = _reference(x2, w2, bb2, timestep=T2, scale=2)
    assert jnp.allclose(out2, ref2, atol=1e-5, rtol=1e-5)

    print("KERNEL_OK")
</pallas_src>

<mosaic_0001>
module attributes {stable_mosaic.version = 11 : i64} {
  func.func @_lagscale_kernel(%arg0: i32, %arg1: memref<8x8xf32, #tpu.memory_space<vmem>>, %arg2: memref<8x128xf32, #tpu.memory_space<vmem>>, %arg3: memref<1x128xf32, #tpu.memory_space<vmem>>, %arg4: memref<8x128xf32, #tpu.memory_space<vmem>>) attributes {dimension_semantics = [#tpu.dimension_semantics<parallel>], iteration_bounds = array<i64: 1>, scalar_prefetch = 0 : i64, scratch_operands = 0 : i64, tpu.core_type = #tpu.core_type<tc>, window_params = [{transform_indices = @transform_0, window_bounds = array<i64: 8, 8>}, {pipeline_mode = #tpu.pipeline_mode<synchronous>, transform_indices = @transform_1, window_bounds = array<i64: 8, 128>}, {pipeline_mode = #tpu.pipeline_mode<synchronous>, transform_indices = @transform_2, window_bounds = array<i64: 1, 128>}, {transform_indices = @transform_3, window_bounds = array<i64: 8, 128>}]} {
    %c0 = arith.constant 0 : index
    %c0_0 = arith.constant 0 : index
    %0 = vector.load %arg1[%c0, %c0_0] : memref<8x8xf32, #tpu.memory_space<vmem>>, vector<8x8xf32>
    %c0_1 = arith.constant 0 : index
    %c0_2 = arith.constant 0 : index
    %1 = vector.load %arg2[%c0_1, %c0_2] : memref<8x128xf32, #tpu.memory_space<vmem>>, vector<8x128xf32>
    %cst = arith.constant dense<0.000000e+00> : vector<8x128xf32>
    %2 = tpu.matmul %0, %1, %cst {dimension_numbers = #tpu.dot_dimension_numbers<[1], [0], [0], [1], [0, 0, 1, 1], [], []>} : vector<8x8xf32>, vector<8x128xf32>, vector<8x128xf32> -> vector<8x128xf32>
    %c0_3 = arith.constant 0 : index
    %c0_4 = arith.constant 0 : index
    %3 = vector.load %arg3[%c0_3, %c0_4] : memref<1x128xf32, #tpu.memory_space<vmem>>, vector<1x128xf32>
    %4 = vector.broadcast %3 : vector<1x128xf32> to vector<8x128xf32>
    %5 = arith.addf %2, %4 : vector<8x128xf32>
    %cst_5 = arith.constant 5.000000e-01 : f32
    %6 = vector.broadcast %cst_5 : f32 to vector<8x128xf32>
    %7 = arith.mulf %6, %5 : vector<8x128xf32>
    %cst_6 = arith.constant 0.707106769 : f32
    %8 = vector.broadcast %cst_6 : f32 to vector<8x128xf32>
    %9 = arith.mulf %5, %8 : vector<8x128xf32>
    %10 = math.erf %9 : vector<8x128xf32>
    %cst_7 = arith.constant 1.000000e+00 : f32
    %11 = vector.broadcast %cst_7 : f32 to vector<8x128xf32>
    %12 = arith.addf %11, %10 : vector<8x128xf32>
    %13 = arith.mulf %7, %12 : vector<8x128xf32>
    %c0_8 = arith.constant 0 : index
    %c0_9 = arith.constant 0 : index
    %14 = vector.load %arg4[%c0_8, %c0_9] : memref<8x128xf32, #tpu.memory_space<vmem>>, vector<8x128xf32>
    tpu.vector_store %arg4[%c0_8, %c0_9], %13 {strides = array<i32>} : memref<8x128xf32, #tpu.memory_space<vmem>>, vector<8x128xf32>,
    return
  }
  func.func @transform_0(%arg0: i32) -> (i32, i32) {
    %c0_i32 = arith.constant 0 : i32
    %c0_i32_0 = arith.constant 0 : i32
    return %arg0, %c0_i32 : i32, i32
  }
  func.func @transform_1(%arg0: i32) -> (i32, i32) {
    %c0_i32 = arith.constant 0 : i32
    %c0_i32_0 = arith.constant 0 : i32
    %c0_i32_1 = arith.constant 0 : i32
    return %c0_i32, %c0_i32_0 : i32, i32
  }
  func.func @transform_2(%arg0: i32) -> (i32, i32) {
    %c0_i32 = arith.constant 0 : i32
    %c0_i32_0 = arith.constant 0 : i32
    %c0_i32_1 = arith.constant 0 : i32
    return %c0_i32, %c0_i32_0 : i32, i32
  }
  func.func @transform_3(%arg0: i32) -> (i32, i32) {
    %c0_i32 = arith.constant 0 : i32
    %c0_i32_0 = arith.constant 0 : i32
    return %arg0, %c0_i32 : i32, i32
  }
}

</mosaic_0001>

<llo_original>
// kernel: tpu_custom_call.1
$region0: #{tpu_custom_call.1}
  #allocation0 [shape = 'u32[]', space=smem, size = 0x4, offset = 0x4, fixed_abs, tag = 'smem constant byte address 0x4 - core index']
  #allocation1 [shape = 'u32[144,128]{1,0:T(1,128)}', space=vmem, size = 0x12000, scoped, tag = 'internal scratch']
  %s0 = inlined_call_operand.hbm [shape: f32[8,8], index: 0, kind: input, shape index: {}]
  %s1 = inlined_call_operand.hbm [shape: f32[8,128], index: 1, kind: input, shape index: {}]
  %s2 = inlined_call_operand.vmem [shape: f32[1,128], index: 2, kind: input, shape index: {}]
  %s3 = inlined_call_operand.hbm [shape: f32[8,128], index: 3, kind: output, shape index: {}]
  %s4 = sld [smem:[#allocation0]]
  $region30: #{tpu_custom_call.1} parent=0
    _
  %s6 = ssub.s32 1, %s4
  %s7 = scalar_select 0, %s6, %s4
  $region1: #{tpu_custom_call.1} parent=0
    #allocation2 [shape = 'u8[4096]{0}', space=vmem, size = 0x1000, scoped, tag = 'input window, operand 0, single buffered']
    #allocation3 [shape = 's32[1]{0}', space=sflag, size = 0x4, scoped, tag = 'scoped memory for tpu_custom_call.1']
    #allocation4 [shape = 's32[1]{0}', space=sflag, size = 0x4, scoped, tag = 'scoped memory for tpu_custom_call.1']
    #allocation5 [shape = 'u8[4096]{0}', space=vmem, size = 0x1000, scoped, tag = 'input window, operand 1, single buffered']
    #allocation6 [shape = 's32[1]{0}', space=sflag, size = 0x4, scoped, tag = 'scoped memory for tpu_custom_call.1']
    #allocation7 [shape = 'u8[4096]{0}', space=vmem, size = 0x1000, scoped, tag = 'output window, operand 0, single buffered']
    %8 = vsyncpa [#allocation3], 0
    %9 = vsyncpa [#allocation6], 0
    %10 = vsyncpa [#allocation4], 0
    // Predicated region
    $region2: #{tpu_custom_call.1} parent=1 // pred_check
      _
    $region3: #{tpu_custom_call.1} parent=1 // pred_check_branch
      %12 = sbr.rel (0) target = $region5
    $region4: #{tpu_custom_call.1} parent=1 // pred_region
      %s14 = ssub.s32 128, 128
      %15 = vsyncadd [#allocation3], %s14
      %s17 = sshll.u32 [#allocation2], 4
      %s18 = int_to_ptr.vmem [resolvable:$true] %s17
      %20 = dma.hbm_to_vmem [thread:$0]  %s0, 128, %s18, [#allocation3]
    $region5: #{tpu_custom_call.1} parent=1 // pred_fallthru
      _
    // Predicated region
    $region6: #{tpu_custom_call.1} parent=1 // pred_check
      _
    $region7: #{tpu_custom_call.1} parent=1 // pred_check_branch
      %22 = sbr.rel (0) target = $region9
    $region8: #{tpu_custom_call.1} parent=1 // pred_region
      %s24 = ssub.s32 128, 128
      %25 = vsyncadd [#allocation6], %s24
      %s27 = sshll.u32 [#allocation5], 4
      %s28 = int_to_ptr.vmem [resolvable:$true] %s27
      %30 = dma.hbm_to_vmem [thread:$0]  %s1, 128, %s28, [#allocation6]
    $region9: #{tpu_custom_call.1} parent=1 // pred_fallthru
      _
    // Predicated region
    $region10: #{tpu_custom_call.1} parent=1 // pred_check
      _
    $region11: #{tpu_custom_call.1} parent=1 // pred_check_branch
      %32 = sbr.rel (0) target = $region13
    $region12: #{tpu_custom_call.1} parent=1 // pred_region
      _
    $region13: #{tpu_custom_call.1} parent=1 // pred_fallthru
      _
    // Predicated region
    $region14: #{tpu_custom_call.1} parent=1 // pred_check
      _
    $region15: #{tpu_custom_call.1} parent=1 // pred_check_branch
      %34 = sbr.rel (0) target = $region17
    $region16: #{tpu_custom_call.1} parent=1 // pred_region
      %35 = dma.done [#allocation3], 128
    $region17: #{tpu_custom_call.1} parent=1 // pred_fallthru
      _
    // Predicated region
    $region18: #{tpu_custom_call.1} parent=1 // pred_check
      _
    $region19: #{tpu_custom_call.1} parent=1 // pred_check_branch
      %37 = sbr.rel (0) target = $region21
    $region20: #{tpu_custom_call.1} parent=1 // pred_region
      %38 = dma.done [#allocation6], 128
    $region21: #{tpu_custom_call.1} parent=1 // pred_fallthru
      _
    %v39 = vld [vmem:[#allocation2] sm:$0xff]
    %v40 = vld [vmem:[#allocation5] sm:$0xff]
    %v41 = vld [vmem:[%s2] sm:$0x1]
    %v43 = vlaneseq
    %v44 = vshrl.u32 %v43, 7
    %v45 = vsub.s32 0, %v44
    %v46 = vrot.slane %v41, %v45
    %vm48 = vcmask 64512
    %v50 = vsel %vm48, %v39, 0
    %52 = vmatprep.subr.mxu0 0.0
    %53 = vmatpush1.msra.mxu0 0.0
    %54 = vmatprep.subr.mxu0 0.0
    %55 = vmatpush1.msra.mxu0 0.0
    %56 = vmatprep.subr.mxu0 0.0
    %57 = vmatpush1.msra.mxu0 0.0
    %58 = vmatprep.subr.mxu0 0.0
    %59 = vmatpush1.msra.mxu0 0.0
    %60 = vmatprep.subr.mxu0 0.0
    %61 = vmatpush1.msra.mxu0 0.0
    %62 = vmatprep.subr.mxu0 0.0
    %63 = vmatpush1.msra.mxu0 0.0
    %64 = vmatprep.subr.mxu0 0.0
    %65 = vmatpush1.msra.mxu0 0.0
    %66 = vmatprep.subr.mxu0 0.0
    %67 = vmatpush1.msra.mxu0 0.0
    %68 = vmatprep.subr.mxu0 0.0
    %69 = vmatpush1.msra.mxu0 0.0
    %70 = vmatprep.subr.mxu0 0.0
    %71 = vmatpush1.msra.mxu0 0.0
    %72 = vmatprep.subr.mxu0 0.0
    %73 = vmatpush1.msra.mxu0 0.0
    %74 = vmatprep.subr.mxu0 0.0
    %75 = vmatpush1.msra.mxu0 0.0
    %76 = vmatprep.subr.mxu0 0.0
    %77 = vmatpush1.msra.mxu0 0.0
    %78 = vmatprep.subr.mxu0 0.0
    %79 = vmatpush1.msra.mxu0 0.0
    %80 = vmatprep.subr.mxu0 0.0
    %81 = vmatpush1.msra.mxu0 0.0
    %82 = vmatprep.subr.mxu0 0.0
    %83 = vmatpush1.msra.mxu0 %v40
    %84 = vmatprep.subr.mxu0 0.0
    %85 = vmatpush2.msra.mxu0 0.0
    %86 = vmatprep.subr.mxu0 0.0
    %87 = vmatpush2.msra.mxu0 0.0
    %88 = vmatprep.subr.mxu0 0.0
    %89 = vmatpush2.msra.mxu0 0.0
    %90 = vmatprep.subr.mxu0 0.0
    %91 = vmatpush2.msra.mxu0 0.0
    %92 = vmatprep.subr.mxu0 0.0
    %93 = vmatpush2.msra.mxu0 0.0
    %94 = vmatprep.subr.mxu0 0.0
    %95 = vmatpush2.msra.mxu0 0.0
    %96 = vmatprep.subr.mxu0 0.0
    %97 = vmatpush2.msra.mxu0 0.0
    %98 = vmatprep.subr.mxu0 0.0
    %99 = vmatpush2.msra.mxu0 0.0
    %100 = vmatprep.subr.mxu0 0.0
    %101 = vmatpush2.msra.mxu0 0.0
    %102 = vmatprep.subr.mxu0 0.0
    %103 = vmatpush2.msra.mxu0 0.0
    %104 = vmatprep.subr.mxu0 0.0
    %105 = vmatpush2.msra.mxu0 0.0
    %106 = vmatprep.subr.mxu0 0.0
    %107 = vmatpush2.msra.mxu0 0.0
    %108 = vmatprep.subr.mxu0 0.0
    %109 = vmatpush2.msra.mxu0 0.0
    %110 = vmatprep.subr.mxu0 0.0
    %111 = vmatpush2.msra.mxu0 0.0
    %112 = vmatprep.subr.mxu0 0.0
    %113 = vmatpush2.msra.mxu0 0.0
    %114 = vmatprep.subr.mxu0 0.0
    %115 = vmatpush2.msra.mxu0 0.0
    %116 = vmatprep.mubr.f32.mxu0 0.0
    %117 = vmatmul.mubr.f32.gmra.mxu0 %v50
    %v118 = vpop.f32.mrf.mxu0
    %v119 = vadd.f32 %v46, %v118
    %v120 = vpop.f32.mrf.mxu0
    %121 = vdwg.mxu0
    %v122 = vmul.f32 %v119, 0.5
    %v123 = vmul.f32 %v119, 0.70710677
    %v124 = verf.f32.pop %v123
    %v125 = vadd.f32 %v124, 1.0
    %v126 = vmul.f32 %v122, %v125
    %127 = vst [vmem:[#allocation7] sm:$0xff] %v126
    // Predicated region
    $region22: #{tpu_custom_call.1} parent=1 // pred_check
      _
    $region23: #{tpu_custom_call.1} parent=1 // pred_check_branch
      %129 = sbr.rel (0) target = $region25
    $region24: #{tpu_custom_call.1} parent=1 // pred_region
      %s131 = ssub.s32 128, 128
      %132 = vsyncadd [#allocation4], %s131
      %s134 = sshll.u32 [#allocation7], 4
      %s135 = int_to_ptr.vmem [resolvable:$true] %s134
      %137 = dma.vmem_to_hbm [thread:$0]  %s135, 128, %s3, [#allocation4]
    $region25: #{tpu_custom_call.1} parent=1 // pred_fallthru
      _
    // Predicated region
    $region26: #{tpu_custom_call.1} parent=1 // pred_check
      _
    $region27: #{tpu_custom_call.1} parent=1 // pred_check_branch
      %139 = sbr.rel (0) target = $region29
    $region28: #{tpu_custom_call.1} parent=1 // pred_region
      %140 = dma.done [#allocation4], 128
    $region29: #{tpu_custom_call.1} parent=1 // pred_fallthru
      _
    %141 = vsyncpa [#allocation3], 1
    %142 = vsyncpa [#allocation6], 1
    %143 = vsyncpa [#allocation4], 1

</llo_original>
